<compile_context>
chip_gen: v7x
topology: tpu7x:2x2x1
jax: 0.10.0
libtpu: 0.0.40
codegen_flags: <defaults>
</compile_context>

<pallas_src>
import math

import jax
import jax.numpy as jnp
from jax.experimental import pallas as pl
from jax.experimental.pallas import tpu as pltpu


def pe_mixdim_kernel(x_ref, scales_ref, out_ref):
    # x_ref: (tn, dim)  scales_ref: (1, P)  out_ref: (tn, 2*P)
    dim = x_ref.shape[-1]
    pe = scales_ref.shape[-1]

    # Sum coordinates over the tiny static input dim on the VPU (unrolled
    # column adds, no MXU / cross-lane reduce needed), then one broadcast mul.
    s = x_ref[:, 0:1].astype(jnp.float32)
    for i in range(1, dim):
        s = s + x_ref[:, i:i + 1].astype(jnp.float32)
    encd = s * scales_ref[...]                      # (tn,1)*(1,P) -> (tn,P) f32

    # Direct slab stores into each output half (avoids materializing a
    # (tn, 2*P) concat temporary and its relayout).
    out_ref[:, :pe] = jnp.sin(encd).astype(out_ref.dtype)
    out_ref[:, pe:] = jnp.cos(encd).astype(out_ref.dtype)


def pe_mixdim_forward(coords, scales, *, tile_n=1024, out_dtype=jnp.float32):
    """coords: [..., dim]; scales: [P] (or [1, P]). Returns [..., 2*P].

    The original module's forward takes `(coords, _)`; only coords is used.
    out_dtype=jnp.bfloat16 halves the dominant HBM write traffic if the
    consumer tolerates it (compute stays f32).
    """
    *lead, dim = coords.shape
    scales2d = jnp.asarray(scales, jnp.float32).reshape(1, -1)
    P = scales2d.shape[-1]

    n = int(math.prod(lead)) if lead else 1
    x = coords.reshape(n, dim).astype(jnp.float32)

    # Large row tile (per-step overhead + tiny DMAs dominate at small tiles for
    # this mem-bound op).  Multiple of 8, capped to the rounded-up row count.
    n_round = ((n + 7) // 8) * 8
    tn = max(8, (min(int(tile_n), n_round) // 8) * 8)
    grid = (pl.cdiv(n, tn),)

    # Explicit VMEM budget: double-buffered in/out tiles + resident scales,
    # capped well under v7x's 64 MiB physical VMEM (v5e/v6e have 128 MiB).
    tile_bytes = tn * (dim + 2 * P) * 4
    vmem_limit = int(min(48 * 1024 * 1024,
                         max(16 * 1024 * 1024, 4 * tile_bytes + 64 * 1024)))

    out = pl.pallas_call(
        pe_mixdim_kernel,
        out_shape=jax.ShapeDtypeStruct((n, 2 * P), out_dtype),
        grid_spec=pltpu.PrefetchScalarGridSpec(
            num_scalar_prefetch=0,
            grid=grid,
            in_specs=[
                pl.BlockSpec((tn, dim), lambda i: (i, 0)),
                pl.BlockSpec((1, P), lambda i: (0, 0)),   # VMEM-resident scales
            ],
            out_specs=pl.BlockSpec((tn, 2 * P), lambda i: (i, 0)),
        ),
        compiler_params=pltpu.CompilerParams(
            # "parallel" shards the row grid across v7x's 2 TensorCores;
            # measured-neutral (harmless) on single-TC v5e/v6e.
            dimension_semantics=("parallel",),
            vmem_limit_bytes=vmem_limit,
        ),
    )(x, scales2d)

    return out.reshape(*lead, 2 * P)


def pe_mixdim_reference(coords, scales):
    scales = jnp.asarray(scales, jnp.float32).reshape(-1)
    s = jnp.sum(coords.astype(jnp.float32), axis=-1, keepdims=True)
    encd = s * scales
    return jnp.concatenate([jnp.sin(encd), jnp.cos(encd)], axis=-1)


if __name__ == "__main__":
    # pe_args = (dim, min_deg, max_deg, float_tensor, verbose)
    dim, min_deg, max_deg = 3, 0, 16
    bsz, nsmpl = 2, 8
    P = max_deg - min_deg

    key = jax.random.PRNGKey(0)
    coords = jax.random.normal(key, (bsz, nsmpl, dim), jnp.float32)
    scales = jnp.arange(min_deg, max_deg, dtype=jnp.float32)   # [P]

    out = pe_mixdim_forward(coords, scales)
    out = jax.block_until_ready(out)

    ref = pe_mixdim_reference(coords, scales)
    assert out.shape == (bsz, nsmpl, 2 * P), out.shape
    # Tolerance covers possible sin/cos argument-reduction differences between
    # Mosaic and XLA transcendental expansions at moderate arguments.
    assert jnp.allclose(out, ref, atol=2e-4, rtol=2e-4), \
        float(jnp.max(jnp.abs(out - ref)))

    print("KERNEL_OK")
</pallas_src>

<mosaic_0001>
module attributes {stable_mosaic.version = 11 : i64} {
  func.func @pe_mixdim_kernel(%arg0: i32, %arg1: memref<16x3xf32, #tpu.memory_space<vmem>>, %arg2: memref<1x16xf32, #tpu.memory_space<vmem>>, %arg3: memref<16x32xf32, #tpu.memory_space<vmem>>) attributes {dimension_semantics = [#tpu.dimension_semantics<parallel>], iteration_bounds = array<i64: 1>, scalar_prefetch = 0 : i64, scratch_operands = 0 : i64, tpu.core_type = #tpu.core_type<tc>, window_params = [{transform_indices = @transform_0, window_bounds = array<i64: 16, 3>}, {pipeline_mode = #tpu.pipeline_mode<synchronous>, transform_indices = @transform_1, window_bounds = array<i64: 1, 16>}, {transform_indices = @transform_2, window_bounds = array<i64: 16, 32>}]} {
    %c0 = arith.constant 0 : index
    %c0_0 = arith.constant 0 : index
    %0 = vector.load %arg1[%c0, %c0_0] : memref<16x3xf32, #tpu.memory_space<vmem>>, vector<16x1xf32>
    %c0_1 = arith.constant 0 : index
    %c1 = arith.constant 1 : index
    %1 = vector.load %arg1[%c0_1, %c1] : memref<16x3xf32, #tpu.memory_space<vmem>>, vector<16x1xf32>
    %2 = arith.addf %0, %1 : vector<16x1xf32>
    %c0_2 = arith.constant 0 : index
    %c2 = arith.constant 2 : index
    %3 = vector.load %arg1[%c0_2, %c2] : memref<16x3xf32, #tpu.memory_space<vmem>>, vector<16x1xf32>
    %4 = arith.addf %2, %3 : vector<16x1xf32>
    %c0_3 = arith.constant 0 : index
    %c0_4 = arith.constant 0 : index
    %5 = vector.load %arg2[%c0_3, %c0_4] : memref<1x16xf32, #tpu.memory_space<vmem>>, vector<1x16xf32>
    %6 = vector.broadcast %4 : vector<16x1xf32> to vector<16x16xf32>
    %7 = vector.broadcast %5 : vector<1x16xf32> to vector<16x16xf32>
    %8 = arith.mulf %6, %7 : vector<16x16xf32>
    %9 = math.sin %8 : vector<16x16xf32>
    %c0_5 = arith.constant 0 : index
    %c0_6 = arith.constant 0 : index
    %10 = vector.load %arg3[%c0_5, %c0_6] : memref<16x32xf32, #tpu.memory_space<vmem>>, vector<16x16xf32>
    tpu.vector_store %arg3[%c0_5, %c0_6], %9 {strides = array<i32>} : memref<16x32xf32, #tpu.memory_space<vmem>>, vector<16x16xf32>,
    %11 = math.cos %8 : vector<16x16xf32>
    %c0_7 = arith.constant 0 : index
    %c16 = arith.constant 16 : index
    %12 = vector.load %arg3[%c0_7, %c16] : memref<16x32xf32, #tpu.memory_space<vmem>>, vector<16x16xf32>
    tpu.vector_store %arg3[%c0_7, %c16], %11 {strides = array<i32>} : memref<16x32xf32, #tpu.memory_space<vmem>>, vector<16x16xf32>,
    return
  }
  func.func @transform_0(%arg0: i32) -> (i32, i32) {
    %c0_i32 = arith.constant 0 : i32
    %c0_i32_0 = arith.constant 0 : i32
    return %arg0, %c0_i32 : i32, i32
  }
  func.func @transform_1(%arg0: i32) -> (i32, i32) {
    %c0_i32 = arith.constant 0 : i32
    %c0_i32_0 = arith.constant 0 : i32
    %c0_i32_1 = arith.constant 0 : i32
    return %c0_i32, %c0_i32_0 : i32, i32
  }
  func.func @transform_2(%arg0: i32) -> (i32, i32) {
    %c0_i32 = arith.constant 0 : i32
    %c0_i32_0 = arith.constant 0 : i32
    return %arg0, %c0_i32 : i32, i32
  }
}

</mosaic_0001>

<llo_original>
// kernel: tpu_custom_call.1
$region0: #{tpu_custom_call.1}
  #allocation0 [shape = 'u32[]', space=smem, size = 0x4, offset = 0x4, fixed_abs, tag = 'smem constant byte address 0x4 - core index']
  #allocation1 [shape = 'u32[144,128]{1,0:T(1,128)}', space=vmem, size = 0x12000, scoped, tag = 'internal scratch']
  %s0 = inlined_call_operand.vmem [shape: f32[16,3], index: 0, kind: input, shape index: {}]
  %s1 = inlined_call_operand.vmem [shape: f32[1,16], index: 1, kind: input, shape index: {}]
  %s2 = inlined_call_operand.hbm [shape: f32[16,32], index: 2, kind: output, shape index: {}]
  %s3 = sld [smem:[#allocation0]]
  $region18: #{tpu_custom_call.1} parent=0
    _
  %s5 = ssub.s32 1, %s3
  %s6 = scalar_select 0, %s5, %s3
  $region1: #{tpu_custom_call.1} parent=0
    #allocation2 [shape = 'u8[8192]{0}', space=vmem, size = 0x2000, scoped, tag = 'output window, operand 0, single buffered']
    #allocation3 [shape = 's32[1]{0}', space=sflag, size = 0x4, scoped, tag = 'scoped memory for tpu_custom_call.1']
    %7 = vsyncpa [#allocation3], 0
    // Predicated region
    $region2: #{tpu_custom_call.1} parent=1 // pred_check
      _
    $region3: #{tpu_custom_call.1} parent=1 // pred_check_branch
      %9 = sbr.rel (0) target = $region5
    $region4: #{tpu_custom_call.1} parent=1 // pred_region
      _
    $region5: #{tpu_custom_call.1} parent=1 // pred_fallthru
      _
    // Predicated region
    $region6: #{tpu_custom_call.1} parent=1 // pred_check
      _
    $region7: #{tpu_custom_call.1} parent=1 // pred_check_branch
      %11 = sbr.rel (0) target = $region9
    $region8: #{tpu_custom_call.1} parent=1 // pred_region
      _
    $region9: #{tpu_custom_call.1} parent=1 // pred_fallthru
      _
    %v12 = vld [vmem:[%s0] sm:$0xff]
    %v13 = vld [vmem:[%s0 + $0x8] sm:$0xff]
    %16 = vrot.lane.b32.xlu0 %v12, 127
    %v17 = vpop.permute.xlu0 %16
    %18 = vrot.lane.b32.xlu0 %v13, 127
    %v19 = vpop.permute.xlu0 %18
    %v22 = vadd.f32 %v12, %v17
    %v23 = vadd.f32 %v13, %v19
    %24 = vrot.lane.b32.xlu0 %v12, 126
    %v25 = vpop.permute.xlu0 %24
    %26 = vrot.lane.b32.xlu0 %v13, 126
    %v27 = vpop.permute.xlu0 %26
    %v30 = vadd.f32 %v22, %v25
    %v31 = vadd.f32 %v23, %v27
    %v32 = vld [vmem:[%s1] sm:$0x1]
    %34 = vset.pattern.permute.xlu0 0
    %35 = vperm.xlu0 %34, %v30
    %v36 = vpop.permute.xlu0 %35
    %39 = vset.pattern.permute.xlu0 0
    %40 = vperm.xlu0 %39, %v31
    %v41 = vpop.permute.xlu0 %40
    %v44 = vlaneseq
    %v45 = vshrl.u32 %v44, 7
    %v46 = vsub.s32 0, %v45
    %v47 = vrot.slane %v32, %v46
    %v49 = vmul.f32 %v36, %v47
    %v50 = vmul.f32 %v41, %v47
    %v51 = vand.u32 2147483647, %v49
    %vm52 = vcmp.le.f32.partialorder %v51, 0.7853982
    %vm53 = vcmp.lt.s32.totalorder %v49, 0
    %v54 = vand.u32 %v49, 2139095040
    %v55 = vshrl.u32 %v54, 23
    %v56 = vsub.s32 %v55, 127
    %v57 = vand.u32 2147483647, %v49
    %v58 = vand.u32 %v57, 8388607
    %v59 = vor.u32 %v58, 8388608
    %v60 = vsub.s32 0, %v59
    %v61 = vadd.s32 %v56, 1
    %vm62 = vcmp.gt.s32.totalorder %v61, 0
    %v63 = vsel %vm62, %v61, 0
    %v64 = vshrl.u32 %v63, 5
    %v65 = vand.u32 %v63, 31
    %v66 = vsub.s32 32, %v65
    %v67 = vshrl.u32 683565275, %v66
    %v68 = vshll.u32 683565275, %v65
    %v69 = vshrl.u32 2475754826, %v66
    %v70 = vor.u32 %v68, %v69
    %v71 = vshll.u32 2475754826, %v65
    %v72 = vshrl.u32 2131351028, %v66
    %v73 = vor.u32 %v71, %v72
    %v74 = vshll.u32 2131351028, %v65
    %v75 = vshrl.u32 2102212464, %v66
    %v76 = vor.u32 %v74, %v75
    %v77 = vshll.u32 2102212464, %v65
    %v78 = vshrl.u32 920167782, %v66
    %v79 = vor.u32 %v77, %v78
    %v80 = vshll.u32 920167782, %v65
    %v81 = vshrl.u32 1326507024, %v66
    %v82 = vor.u32 %v80, %v81
    %vm83 = vcmp.lt.s32.totalorder %v64, 1
    %vm84 = vcmp.lt.s32.totalorder %v64, 2
    %vm85 = vcmp.lt.s32.totalorder %v64, 3
    %vm86 = vcmp.lt.s32.totalorder %v64, 4
    %v87 = vsel %vm83, %v67, %v70
    %v88 = vsel %vm86, %v76, 2102212464
    %v89 = vsel %vm85, %v73, %v88
    %v90 = vsel %vm84, %v87, %v89
    %v91 = vsel %vm83, %v70, %v73
    %v92 = vsel %vm86, %v79, 920167782
    %v93 = vsel %vm85, %v76, %v92
    %v94 = vsel %vm84, %v91, %v93
    %v95 = vsel %vm83, %v73, %v76
    %v96 = vsel %vm86, %v82, 1326507024
    %v97 = vsel %vm85, %v79, %v96
    %v98 = vsel %vm84, %v95, %v97
    %v99 = vshll.u32 %v59, 8
    %v100 = vmul.u32.u64.compose %v99, %v98
    %v101 = vextract.low.u32 %v100
    %v102 = vextract.high.u32 %v100
    %v103 = vmul.u32.u64.compose %v99, %v94
    %v104 = vextract.low.u32 %v103
    %v105 = vextract.high.u32 %v103
    %v106 = vmul.u32 %v99, %v90
    %v107 = vadd.s32 %v102, %v104
    %vm108 = vc.u32 %v102, %v104
    %v109 = vadd.s32 %v105, 1
    %v110 = vsel %vm108, %v109, %v105
    %v111 = vadd.s32 %v106, %v110
    %v112 = vadd.s32 %v111, 536870912
    %v113 = vshrl.u32 %v112, 30
    %v114 = vshll.u32 %v113, 30
    %v115 = vsub.s32 %v111, %v114
    %vm116 = vcmp.lt.s32.totalorder %v115, 0
    %v117 = vsub.s32 0, %v115
    %v118 = vsel %vm116, %v117, %v115
    %v119 = vclz %v118
    %v120 = vsub.s32 %v119, 2
    %vm121 = vcmp.gt.s32.totalorder 0, %v120
    %v122 = vsel %vm121, 0, %v120
    %v123 = vsub.s32 32, %v122
    %v124 = vshll.u32 %v115, %v122
    %v125 = vshrl.u32 %v107, %v123
    %v126 = vor.u32 %v124, %v125
    %v127 = vsub.s32 4294967266, %v122
    %v128 = vadd.s32 %v127, 127
    %v129 = vshll.u32 %v128, 23
    %v130 = vor.u32 4788187, %v129
    %v131 = vand.u32 2147483647, %v130
    %v133 = vcvt.s32.f32 %v126
    %v134 = vmul.f32 %v133, %v131
    %v135 = vxor.u32 %v134, 2147483648
    %v136 = vsel %vm53, %v135, %v134
    %v137 = vsub.s32 4, %v113
    %v138 = vsel %vm53, %v137, %v113
    %v139 = vsel %vm52, %v49, %v136
    %v140 = vsel %vm52, 0, %v138
    %v141 = vcosq.f32.pop %v139
    %v142 = vsinq.f32.pop %v139
    %vm143 = vweird.f32 %v49
    %v144 = vadd.s32 %v140, 3
    %v145 = vand.u32 %v144, 3
    %vm146 = vcmp.lt.s32.totalorder %v145, 2
    %vm147 = vcmp.eq.s32.totalorder %v145, 0
    %v148 = vxor.u32 %v142, 2147483648
    %v149 = vsel %vm147, %v141, %v148
    %vm150 = vcmp.eq.s32.totalorder %v145, 2
    %v151 = vxor.u32 %v141, 2147483648
    %v152 = vsel %vm150, %v151, %v142
    %v153 = vsel %vm146, %v149, %v152
    %v154 = vsel %vm143, nan, %v153
    %v155 = vand.u32 2147483647, %v50
    %vm156 = vcmp.le.f32.partialorder %v155, 0.7853982
    %vm157 = vcmp.lt.s32.totalorder %v50, 0
    %v158 = vand.u32 %v50, 2139095040
    %v159 = vshrl.u32 %v158, 23
    %v160 = vsub.s32 %v159, 127
    %v161 = vand.u32 2147483647, %v50
    %v162 = vand.u32 %v161, 8388607
    %v163 = vor.u32 %v162, 8388608
    %v164 = vsub.s32 0, %v163
    %v165 = vadd.s32 %v160, 1
    %vm166 = vcmp.gt.s32.totalorder %v165, 0
    %v167 = vsel %vm166, %v165, 0
    %v168 = vshrl.u32 %v167, 5
    %v169 = vand.u32 %v167, 31
    %v170 = vsub.s32 32, %v169
    %v171 = vshrl.u32 683565275, %v170
    %v172 = vshll.u32 683565275, %v169
    %v173 = vshrl.u32 2475754826, %v170
    %v174 = vor.u32 %v172, %v173
    %v175 = vshll.u32 2475754826, %v169
    %v176 = vshrl.u32 2131351028, %v170
    %v177 = vor.u32 %v175, %v176
    %v178 = vshll.u32 2131351028, %v169
    %v179 = vshrl.u32 2102212464, %v170
    %v180 = vor.u32 %v178, %v179
    %v181 = vshll.u32 2102212464, %v169
    %v182 = vshrl.u32 920167782, %v170
    %v183 = vor.u32 %v181, %v182
    %v184 = vshll.u32 920167782, %v169
    %v185 = vshrl.u32 1326507024, %v170
    %v186 = vor.u32 %v184, %v185
    %vm187 = vcmp.lt.s32.totalorder %v168, 1
    %vm188 = vcmp.lt.s32.totalorder %v168, 2
    %vm189 = vcmp.lt.s32.totalorder %v168, 3
    %vm190 = vcmp.lt.s32.totalorder %v168, 4
    %v191 = vsel %vm187, %v171, %v174
    %v192 = vsel %vm190, %v180, 2102212464
    %v193 = vsel %vm189, %v177, %v192
    %v194 = vsel %vm188, %v191, %v193
    %v195 = vsel %vm187, %v174, %v177
    %v196 = vsel %vm190, %v183, 920167782
    %v197 = vsel %vm189, %v180, %v196
    %v198 = vsel %vm188, %v195, %v197
    %v199 = vsel %vm187, %v177, %v180
    %v200 = vsel %vm190, %v186, 1326507024
    %v201 = vsel %vm189, %v183, %v200
    %v202 = vsel %vm188, %v199, %v201
    %v203 = vshll.u32 %v163, 8
    %v204 = vmul.u32.u64.compose %v203, %v202
    %v205 = vextract.low.u32 %v204
    %v206 = vextract.high.u32 %v204
    %v207 = vmul.u32.u64.compose %v203, %v198
    %v208 = vextract.low.u32 %v207
    %v209 = vextract.high.u32 %v207
    %v210 = vmul.u32 %v203, %v194
    %v211 = vadd.s32 %v206, %v208
    %vm212 = vc.u32 %v206, %v208
    %v213 = vadd.s32 %v209, 1
    %v214 = vsel %vm212, %v213, %v209
    %v215 = vadd.s32 %v210, %v214
    %v216 = vadd.s32 %v215, 536870912
    %v217 = vshrl.u32 %v216, 30
    %v218 = vshll.u32 %v217, 30
    %v219 = vsub.s32 %v215, %v218
    %vm220 = vcmp.lt.s32.totalorder %v219, 0
    %v221 = vsub.s32 0, %v219
    %v222 = vsel %vm220, %v221, %v219
    %v223 = vclz %v222
    %v224 = vsub.s32 %v223, 2
    %vm225 = vcmp.gt.s32.totalorder 0, %v224
    %v226 = vsel %vm225, 0, %v224
    %v227 = vsub.s32 32, %v226
    %v228 = vshll.u32 %v219, %v226
    %v229 = vshrl.u32 %v211, %v227
    %v230 = vor.u32 %v228, %v229
    %v231 = vsub.s32 4294967266, %v226
    %v232 = vadd.s32 %v231, 127
    %v233 = vshll.u32 %v232, 23
    %v234 = vor.u32 4788187, %v233
    %v235 = vand.u32 2147483647, %v234
    %v237 = vcvt.s32.f32 %v230
    %v238 = vmul.f32 %v237, %v235
    %v239 = vxor.u32 %v238, 2147483648
    %v240 = vsel %vm157, %v239, %v238
    %v241 = vsub.s32 4, %v217
    %v242 = vsel %vm157, %v241, %v217
    %v243 = vsel %vm156, %v50, %v240
    %v244 = vsel %vm156, 0, %v242
    %v245 = vcosq.f32.pop %v243
    %v246 = vsinq.f32.pop %v243
    %vm247 = vweird.f32 %v50
    %v248 = vadd.s32 %v244, 3
    %v249 = vand.u32 %v248, 3
    %vm250 = vcmp.lt.s32.totalorder %v249, 2
    %vm251 = vcmp.eq.s32.totalorder %v249, 0
    %v252 = vxor.u32 %v246, 2147483648
    %v253 = vsel %vm251, %v245, %v252
    %vm254 = vcmp.eq.s32.totalorder %v249, 2
    %v255 = vxor.u32 %v245, 2147483648
    %v256 = vsel %vm254, %v255, %v246
    %v257 = vsel %vm250, %v253, %v256
    %v258 = vsel %vm247, nan, %v257
    %vm259 = vcmask 130048
    %260 = vst.msk [vmem:[#allocation2] sm:$0xff] %vm259, %v154
    %261 = vst.msk [vmem:[#allocation2 + $0x8] sm:$0xff] %vm259, %v258
    %v262 = vand.u32 2147483647, %v49
    %vm263 = vcmp.le.f32.partialorder %v262, 0.7853982
    %vm264 = vcmp.lt.s32.totalorder %v49, 0
    %v265 = vand.u32 %v49, 2139095040
    %v266 = vshrl.u32 %v265, 23
    %v267 = vsub.s32 %v266, 127
    %v268 = vand.u32 2147483647, %v49
    %v269 = vand.u32 %v268, 8388607
    %v270 = vor.u32 %v269, 8388608
    %v271 = vsub.s32 0, %v270
    %v272 = vadd.s32 %v267, 1
    %vm273 = vcmp.gt.s32.totalorder %v272, 0
    %v274 = vsel %vm273, %v272, 0
    %v275 = vshrl.u32 %v274, 5
    %v276 = vand.u32 %v274, 31
    %v277 = vsub.s32 32, %v276
    %v278 = vshrl.u32 683565275, %v277
    %v279 = vshll.u32 683565275, %v276
    %v280 = vshrl.u32 2475754826, %v277
    %v281 = vor.u32 %v279, %v280
    %v282 = vshll.u32 2475754826, %v276
    %v283 = vshrl.u32 2131351028, %v277
    %v284 = vor.u32 %v282, %v283
    %v285 = vshll.u32 2131351028, %v276
    %v286 = vshrl.u32 2102212464, %v277
    %v287 = vor.u32 %v285, %v286
    %v288 = vshll.u32 2102212464, %v276
    %v289 = vshrl.u32 920167782, %v277
    %v290 = vor.u32 %v288, %v289
    %v291 = vshll.u32 920167782, %v276
    %v292 = vshrl.u32 1326507024, %v277
    %v293 = vor.u32 %v291, %v292
    %vm294 = vcmp.lt.s32.totalorder %v275, 1
    %vm295 = vcmp.lt.s32.totalorder %v275, 2
    %vm296 = vcmp.lt.s32.totalorder %v275, 3
    %vm297 = vcmp.lt.s32.totalorder %v275, 4
    %v298 = vsel %vm294, %v278, %v281
    %v299 = vsel %vm297, %v287, 2102212464
    %v300 = vsel %vm296, %v284, %v299
    %v301 = vsel %vm295, %v298, %v300
    %v302 = vsel %vm294, %v281, %v284
    %v303 = vsel %vm297, %v290, 920167782
    %v304 = vsel %vm296, %v287, %v303
    %v305 = vsel %vm295, %v302, %v304
    %v306 = vsel %vm294, %v284, %v287
    %v307 = vsel %vm297, %v293, 1326507024
    %v308 = vsel %vm296, %v290, %v307
    %v309 = vsel %vm295, %v306, %v308
    %v310 = vshll.u32 %v270, 8
    %v311 = vmul.u32.u64.compose %v310, %v309
    %v312 = vextract.low.u32 %v311
    %v313 = vextract.high.u32 %v311
    %v314 = vmul.u32.u64.compose %v310, %v305
    %v315 = vextract.low.u32 %v314
    %v316 = vextract.high.u32 %v314
    %v317 = vmul.u32 %v310, %v301
    %v318 = vadd.s32 %v313, %v315
    %vm319 = vc.u32 %v313, %v315
    %v320 = vadd.s32 %v316, 1
    %v321 = vsel %vm319, %v320, %v316
    %v322 = vadd.s32 %v317, %v321
    %v323 = vadd.s32 %v322, 536870912
    %v324 = vshrl.u32 %v323, 30
    %v325 = vshll.u32 %v324, 30
    %v326 = vsub.s32 %v322, %v325
    %vm327 = vcmp.lt.s32.totalorder %v326, 0
    %v328 = vsub.s32 0, %v326
    %v329 = vsel %vm327, %v328, %v326
    %v330 = vclz %v329
    %v331 = vsub.s32 %v330, 2
    %vm332 = vcmp.gt.s32.totalorder 0, %v331
    %v333 = vsel %vm332, 0, %v331
    %v334 = vsub.s32 32, %v333
    %v335 = vshll.u32 %v326, %v333
    %v336 = vshrl.u32 %v318, %v334
    %v337 = vor.u32 %v335, %v336
    %v338 = vsub.s32 4294967266, %v333
    %v339 = vadd.s32 %v338, 127
    %v340 = vshll.u32 %v339, 23
    %v341 = vor.u32 4788187, %v340
    %v342 = vand.u32 2147483647, %v341
    %v344 = vcvt.s32.f32 %v337
    %v345 = vmul.f32 %v344, %v342
    %v346 = vxor.u32 %v345, 2147483648
    %v347 = vsel %vm264, %v346, %v345
    %v348 = vsub.s32 4, %v324
    %v349 = vsel %vm264, %v348, %v324
    %v350 = vsel %vm263, %v49, %v347
    %v351 = vsel %vm263, 0, %v349
    %v352 = vcosq.f32.pop %v350
    %v353 = vsinq.f32.pop %v350
    %vm354 = vweird.f32 %v49
    %v355 = vand.u32 %v351, 3
    %vm356 = vcmp.lt.s32.totalorder %v355, 2
    %vm357 = vcmp.eq.s32.totalorder %v355, 0
    %v358 = vxor.u32 %v353, 2147483648
    %v359 = vsel %vm357, %v352, %v358
    %vm360 = vcmp.eq.s32.totalorder %v355, 2
    %v361 = vxor.u32 %v352, 2147483648
    %v362 = vsel %vm360, %v361, %v353
    %v363 = vsel %vm356, %v359, %v362
    %v364 = vsel %vm354, nan, %v363
    %v365 = vand.u32 2147483647, %v50
    %vm366 = vcmp.le.f32.partialorder %v365, 0.7853982
    %vm367 = vcmp.lt.s32.totalorder %v50, 0
    %v368 = vand.u32 %v50, 2139095040
    %v369 = vshrl.u32 %v368, 23
    %v370 = vsub.s32 %v369, 127
    %v371 = vand.u32 2147483647, %v50
    %v372 = vand.u32 %v371, 8388607
    %v373 = vor.u32 %v372, 8388608
    %v374 = vsub.s32 0, %v373
    %v375 = vadd.s32 %v370, 1
    %vm376 = vcmp.gt.s32.totalorder %v375, 0
    %v377 = vsel %vm376, %v375, 0
    %v378 = vshrl.u32 %v377, 5
    %v379 = vand.u32 %v377, 31
    %v380 = vsub.s32 32, %v379
    %v381 = vshrl.u32 683565275, %v380
    %v382 = vshll.u32 683565275, %v379
    %v383 = vshrl.u32 2475754826, %v380
    %v384 = vor.u32 %v382, %v383
    %v385 = vshll.u32 2475754826, %v379
    %v386 = vshrl.u32 2131351028, %v380
    %v387 = vor.u32 %v385, %v386
    %v388 = vshll.u32 2131351028, %v379
    %v389 = vshrl.u32 2102212464, %v380
    %v390 = vor.u32 %v388, %v389
    %v391 = vshll.u32 2102212464, %v379
    %v392 = vshrl.u32 920167782, %v380
    %v393 = vor.u32 %v391, %v392
    %v394 = vshll.u32 920167782, %v379
    %v395 = vshrl.u32 1326507024, %v380
    %v396 = vor.u32 %v394, %v395
    %vm397 = vcmp.lt.s32.totalorder %v378, 1
    %vm398 = vcmp.lt.s32.totalorder %v378, 2
    %vm399 = vcmp.lt.s32.totalorder %v378, 3
    %vm400 = vcmp.lt.s32.totalorder %v378, 4
    %v401 = vsel %vm397, %v381, %v384
    %v402 = vsel %vm400, %v390, 2102212464
    %v403 = vsel %vm399, %v387, %v402
    %v404 = vsel %vm398, %v401, %v403
    %v405 = vsel %vm397, %v384, %v387
    %v406 = vsel %vm400, %v393, 920167782
    %v407 = vsel %vm399, %v390, %v406
    %v408 = vsel %vm398, %v405, %v407
    %v409 = vsel %vm397, %v387, %v390
    %v410 = vsel %vm400, %v396, 1326507024
    %v411 = vsel %vm399, %v393, %v410
    %v412 = vsel %vm398, %v409, %v411
    %v413 = vshll.u32 %v373, 8
    %v414 = vmul.u32.u64.compose %v413, %v412
    %v415 = vextract.low.u32 %v414
    %v416 = vextract.high.u32 %v414
    %v417 = vmul.u32.u64.compose %v413, %v408
    %v418 = vextract.low.u32 %v417
    %v419 = vextract.high.u32 %v417
    %v420 = vmul.u32 %v413, %v404
    %v421 = vadd.s32 %v416, %v418
    %vm422 = vc.u32 %v416, %v418
    %v423 = vadd.s32 %v419, 1
    %v424 = vsel %vm422, %v423, %v419
    %v425 = vadd.s32 %v420, %v424
    %v426 = vadd.s32 %v425, 536870912
    %v427 = vshrl.u32 %v426, 30
    %v428 = vshll.u32 %v427, 30
    %v429 = vsub.s32 %v425, %v428
    %vm430 = vcmp.lt.s32.totalorder %v429, 0
    %v431 = vsub.s32 0, %v429
    %v432 = vsel %vm430, %v431, %v429
    %v433 = vclz %v432
    %v434 = vsub.s32 %v433, 2
    %vm435 = vcmp.gt.s32.totalorder 0, %v434
    %v436 = vsel %vm435, 0, %v434
    %v437 = vsub.s32 32, %v436
    %v438 = vshll.u32 %v429, %v436
    %v439 = vshrl.u32 %v421, %v437
    %v440 = vor.u32 %v438, %v439
    %v441 = vsub.s32 4294967266, %v436
    %v442 = vadd.s32 %v441, 127
    %v443 = vshll.u32 %v442, 23
    %v444 = vor.u32 4788187, %v443
    %v445 = vand.u32 2147483647, %v444
    %v447 = vcvt.s32.f32 %v440
    %v448 = vmul.f32 %v447, %v445
    %v449 = vxor.u32 %v448, 2147483648
    %v450 = vsel %vm367, %v449, %v448
    %v451 = vsub.s32 4, %v427
    %v452 = vsel %vm367, %v451, %v427
    %v453 = vsel %vm366, %v50, %v450
    %v454 = vsel %vm366, 0, %v452
    %v455 = vcosq.f32.pop %v453
    %v456 = vsinq.f32.pop %v453
    %vm457 = vweird.f32 %v50
    %v458 = vand.u32 %v454, 3
    %vm459 = vcmp.lt.s32.totalorder %v458, 2
    %vm460 = vcmp.eq.s32.totalorder %v458, 0
    %v461 = vxor.u32 %v456, 2147483648
    %v462 = vsel %vm460, %v455, %v461
    %vm463 = vcmp.eq.s32.totalorder %v458, 2
    %v464 = vxor.u32 %v455, 2147483648
    %v465 = vsel %vm463, %v464, %v456
    %v466 = vsel %vm459, %v462, %v465
    %v467 = vsel %vm457, nan, %v466
    %470 = vrot.lane.b32.xlu0 %v364, 16
    %v471 = vpop.permute.xlu0 %470
    %472 = vrot.lane.b32.xlu0 %v467, 16
    %v473 = vpop.permute.xlu0 %472
    %vm476 = vcmask 261248
    %477 = vst.msk [vmem:[#allocation2] sm:$0xff] %vm476, %v471
    %478 = vst.msk [vmem:[#allocation2 + $0x8] sm:$0xff] %vm476, %v473
    // Predicated region
    $region10: #{tpu_custom_call.1} parent=1 // pred_check
      _
    $region11: #{tpu_custom_call.1} parent=1 // pred_check_branch
      %480 = sbr.rel (0) target = $region13
    $region12: #{tpu_custom_call.1} parent=1 // pred_region
      %s482 = ssub.s32 256, 256
      %483 = vsyncadd [#allocation3], %s482
      %s484 = sshll.u32 [#allocation2], 4
      %s485 = int_to_ptr.vmem [resolvable:$true] %s484
      %490 = dma.vmem_to_hbm [thread:$0]  %s485, 256, %s2, [#allocation3], 128, 128, 8
    $region13: #{tpu_custom_call.1} parent=1 // pred_fallthru
      _
    // Predicated region
    $region14: #{tpu_custom_call.1} parent=1 // pred_check
      _
    $region15: #{tpu_custom_call.1} parent=1 // pred_check_branch
      %492 = sbr.rel (0) target = $region17
    $region16: #{tpu_custom_call.1} parent=1 // pred_region
      %493 = dma.done [#allocation3], 256
    $region17: #{tpu_custom_call.1} parent=1 // pred_fallthru
      _
    %494 = vsyncpa [#allocation3], 1

</llo_original>
